<compile_context>
chip_gen: v6e
topology: v6e:2x2x1
jax: 0.10.0
libtpu: 0.0.40
codegen_flags: <defaults>
</compile_context>

<pallas_src>
import jax
import jax.numpy as jnp
from jax.experimental import pallas as pl
from jax.experimental.pallas import tpu as pltpu

LANE = 128          # narrow layer widths (64 / 16 / 2) zero-padded to a vreg
MAX_TILE_B = 2048   # rows per grid step (multiple of 8), ~20 MiB peak VMEM


def _round_up(n, m):
    return ((n + m - 1) // m) * m


def _cdiv(a, b):
    return -(-a // b)


def encoder_kernel(x_ref,
                   w1_ref, b1_ref,
                   w2_ref, b2_ref,
                   w3_ref, b3_ref,
                   w4_ref, b4_ref,
                   o_ref):
    """One row-tile of the batch; weights stay VMEM-resident across the grid."""
    # bf16 operands into the MXU, f32 accumulation + f32 bias/ReLU on the VPU.
    x = x_ref[...].astype(jnp.bfloat16)

    h1 = jnp.maximum(
        jnp.dot(x, w1_ref[...], preferred_element_type=jnp.float32) + b1_ref[...],
        0.0)
    h2 = jnp.maximum(
        jnp.dot(h1.astype(jnp.bfloat16), w2_ref[...],
                preferred_element_type=jnp.float32) + b2_ref[...],
        0.0)
    h3 = jnp.maximum(
        jnp.dot(h2.astype(jnp.bfloat16), w3_ref[...],
                preferred_element_type=jnp.float32) + b3_ref[...],
        0.0)
    h4 = jnp.dot(h3.astype(jnp.bfloat16), w4_ref[...],
                 preferred_element_type=jnp.float32) + b4_ref[...]
    # Only the first 2 lanes are real (padded lanes are exactly zero); store
    # them directly so the HBM output is (tile_b, 2), not (tile_b, 128).
    o_ref[...] = h4[:, :2]


def _prepare_params(params):
    """Zero-pad narrow dims to 128 lanes; weights -> bf16, biases stay f32.

    Zero weight columns/rows + zero bias keep the padded lanes exactly zero
    (ReLU(0)=0 and the next layer's padded rows are zero), so the result
    matches the unpadded computation up to bf16 operand rounding only.
    """
    def pad2(a, rows, cols):
        r, c = a.shape
        return jnp.pad(a, ((0, rows - r), (0, cols - c)))

    return (
        params["w1"].astype(jnp.bfloat16),                    # [in, 512]
        params["b1"],                                         # [1, 512]   f32
        pad2(params["w2"], 512, LANE).astype(jnp.bfloat16),   # [512, 128]
        pad2(params["b2"], 1, LANE),                          # [1, 128]   f32
        pad2(params["w3"], LANE, LANE).astype(jnp.bfloat16),  # [128, 128]
        pad2(params["b3"], 1, LANE),                          # [1, 128]   f32
        pad2(params["w4"], LANE, LANE).astype(jnp.bfloat16),  # [128, 128]
        pad2(params["b4"], 1, LANE),                          # [1, 128]   f32
    )


def _choose_tiling(B, max_tile=MAX_TILE_B):
    """Pick (tile_b, n_tiles, b_padded): large tiles, minimal padding, and an
    even tile count when B is large so v7x's two TensorCores split evenly."""
    b8 = _round_up(B, 8)
    if b8 <= max_tile:
        n_tiles = 2 if b8 >= 1024 else 1       # >=2 tiles lets v7x use both TCs
    else:
        n_tiles = _round_up(_cdiv(b8, max_tile), 2)
    tile_b = _round_up(_cdiv(b8, n_tiles), 8)
    return tile_b, n_tiles, tile_b * n_tiles


def encoder_forward(x, params, *, max_tile=MAX_TILE_B, min_pallas_batch=0):
    """x: [B, input_size] float32. params: transposed [in,out] weights, [1,out] biases.

    min_pallas_batch: below this batch size the fused XLA path is used (the
    run is launch/DMA fixed-cost bound there).  Default 0 keeps the Pallas
    path so tests exercise the kernel; production would use ~256.
    """
    B, in_size = x.shape
    if B < min_pallas_batch:
        return reference_forward(x, params)

    tile_b, n_tiles, b_padded = _choose_tiling(B, max_tile)
    if b_padded != B:
        x = jnp.pad(x, ((0, b_padded - B), (0, 0)))

    weights = _prepare_params(params)

    x_spec = pl.BlockSpec((tile_b, in_size), lambda i: (i, 0),
                          memory_space=pltpu.VMEM)
    # Weights/biases: constant block index -> DMA'd once, VMEM-resident.
    # NOTE: for very large input_size on v7x (64 MiB VMEM), w1 would need a K
    # grid axis / single-buffered constants; not needed at these sizes.
    const_specs = [pl.BlockSpec(a.shape, lambda i: (0, 0),
                                memory_space=pltpu.VMEM) for a in weights]
    out_spec = pl.BlockSpec((tile_b, 2), lambda i: (i, 0),
                            memory_space=pltpu.VMEM)

    weight_bytes = sum(int(a.size) * a.dtype.itemsize for a in weights)
    x_tile_bytes = tile_b * in_size * 4
    out_tile_bytes = tile_b * 2 * 4
    act_bytes = tile_b * (512 + 3 * LANE) * 4            # f32 h1..h4 temporaries
    vmem_est = 2 * (x_tile_bytes + out_tile_bytes + weight_bytes) + 2 * act_bytes
    vmem_limit = int(min(32 << 20, max(8 << 20, vmem_est + (4 << 20))))

    flops = 2 * b_padded * (in_size * 512 + 512 * LANE + LANE * LANE + LANE * LANE)
    bytes_accessed = 4 * b_padded * in_size + 8 * b_padded + weight_bytes

    out = pl.pallas_call(
        encoder_kernel,
        out_shape=jax.ShapeDtypeStruct((b_padded, 2), jnp.float32),
        grid=(n_tiles,),
        in_specs=[x_spec] + const_specs,
        out_specs=out_spec,
        compiler_params=pltpu.CompilerParams(
            dimension_semantics=("parallel",),   # 2 TCs on v7x; no-op on v5e/v6e
            vmem_limit_bytes=vmem_limit,
        ),
        cost_estimate=pl.CostEstimate(flops=flops, transcendentals=0,
                                      bytes_accessed=bytes_accessed),
    )(x, *weights)

    return out[:B] if b_padded != B else out


def init_params(input_size, key):
    """Deterministic synthetic parameters (same shapes as the torch module).

    torch.nn.Linear(in, out) has weight [out, in] and bias [out]; we store the
    transposed weight [in, out] and bias as [1, out] for in-kernel broadcast.
    """
    dims = [(input_size, 512), (512, 64), (64, 16), (16, 2)]
    params = {}
    for i, (din, dout) in enumerate(dims, start=1):
        key, kw, kb = jax.random.split(key, 3)
        bound = 1.0 / jnp.sqrt(din)  # matches torch default U(-1/sqrt(in), 1/sqrt(in))
        params[f"w{i}"] = jax.random.uniform(kw, (din, dout), jnp.float32,
                                             -bound, bound)
        params[f"b{i}"] = jax.random.uniform(kb, (1, dout), jnp.float32,
                                             -bound, bound)
    return params


def reference_forward(x, params):
    h = jnp.maximum(x @ params["w1"] + params["b1"], 0.0)
    h = jnp.maximum(h @ params["w2"] + params["b2"], 0.0)
    h = jnp.maximum(h @ params["w3"] + params["b3"], 0.0)
    return h @ params["w4"] + params["b4"]


if __name__ == "__main__":
    key = jax.random.PRNGKey(0)
    key, kx, kp = jax.random.split(key, 3)

    B, INPUT_SIZE = 8, 32
    x = jax.random.normal(kx, (B, INPUT_SIZE), jnp.float32)
    params = init_params(INPUT_SIZE, kp)

    out = jax.block_until_ready(encoder_forward(x, params))
    ref = reference_forward(x, params)
    assert out.shape == (B, 2)
    # bf16 MXU operands (f32 accumulation) vs the pure-f32 reference.
    assert jnp.allclose(out, ref, atol=2e-2, rtol=2e-2)

    # Multi-tile path: B=1030 -> 2 balanced tiles of 520 rows (pads 10 rows).
    B2 = 1030
    x2 = jax.random.normal(key, (B2, INPUT_SIZE), jnp.float32)
    out2 = jax.block_until_ready(encoder_forward(x2, params))
    ref2 = reference_forward(x2, params)
    assert out2.shape == (B2, 2)
    assert jnp.allclose(out2, ref2, atol=2e-2, rtol=2e-2)

    print("KERNEL_OK")
</pallas_src>

<mosaic_0001>
module attributes {stable_mosaic.version = 11 : i64} {
  func.func @encoder_kernel(%arg0: i32, %arg1: memref<8x32xf32, #tpu.memory_space<vmem>>, %arg2: memref<32x512xbf16, #tpu.memory_space<vmem>>, %arg3: memref<1x512xf32, #tpu.memory_space<vmem>>, %arg4: memref<512x128xbf16, #tpu.memory_space<vmem>>, %arg5: memref<1x128xf32, #tpu.memory_space<vmem>>, %arg6: memref<128x128xbf16, #tpu.memory_space<vmem>>, %arg7: memref<1x128xf32, #tpu.memory_space<vmem>>, %arg8: memref<128x128xbf16, #tpu.memory_space<vmem>>, %arg9: memref<1x128xf32, #tpu.memory_space<vmem>>, %arg10: memref<8x2xf32, #tpu.memory_space<vmem>>) attributes {dimension_semantics = [#tpu.dimension_semantics<parallel>], iteration_bounds = array<i64: 1>, scalar_prefetch = 0 : i64, scratch_operands = 0 : i64, tpu.core_type = #tpu.core_type<tc>, window_params = [{transform_indices = @transform_0, window_bounds = array<i64: 8, 32>}, {pipeline_mode = #tpu.pipeline_mode<synchronous>, transform_indices = @transform_1, window_bounds = array<i64: 32, 512>}, {pipeline_mode = #tpu.pipeline_mode<synchronous>, transform_indices = @transform_2, window_bounds = array<i64: 1, 512>}, {pipeline_mode = #tpu.pipeline_mode<synchronous>, transform_indices = @transform_3, window_bounds = array<i64: 512, 128>}, {pipeline_mode = #tpu.pipeline_mode<synchronous>, transform_indices = @transform_4, window_bounds = array<i64: 1, 128>}, {pipeline_mode = #tpu.pipeline_mode<synchronous>, transform_indices = @transform_5, window_bounds = array<i64: 128, 128>}, {pipeline_mode = #tpu.pipeline_mode<synchronous>, transform_indices = @transform_6, window_bounds = array<i64: 1, 128>}, {pipeline_mode = #tpu.pipeline_mode<synchronous>, transform_indices = @transform_7, window_bounds = array<i64: 128, 128>}, {pipeline_mode = #tpu.pipeline_mode<synchronous>, transform_indices = @transform_8, window_bounds = array<i64: 1, 128>}, {transform_indices = @transform_9, window_bounds = array<i64: 8, 2>}]} {
    %c0 = arith.constant 0 : index
    %c0_0 = arith.constant 0 : index
    %0 = vector.load %arg1[%c0, %c0_0] : memref<8x32xf32, #tpu.memory_space<vmem>>, vector<8x32xf32>
    %1 = arith.truncf %0 : vector<8x32xf32> to vector<8x32xbf16>
    %c0_1 = arith.constant 0 : index
    %c0_2 = arith.constant 0 : index
    %2 = vector.load %arg2[%c0_1, %c0_2] : memref<32x512xbf16, #tpu.memory_space<vmem>>, vector<32x512xbf16>
    %cst = arith.constant dense<0.000000e+00> : vector<8x512xf32>
    %3 = tpu.matmul %1, %2, %cst {dimension_numbers = #tpu.dot_dimension_numbers<[1], [0], [0], [1], [0, 0, 1, 1], [], []>} : vector<8x32xbf16>, vector<32x512xbf16>, vector<8x512xf32> -> vector<8x512xf32>
    %c0_3 = arith.constant 0 : index
    %c0_4 = arith.constant 0 : index
    %4 = vector.load %arg3[%c0_3, %c0_4] : memref<1x512xf32, #tpu.memory_space<vmem>>, vector<1x512xf32>
    %5 = vector.broadcast %4 : vector<1x512xf32> to vector<8x512xf32>
    %6 = arith.addf %3, %5 : vector<8x512xf32>
    %cst_5 = arith.constant 0.000000e+00 : f32
    %7 = vector.broadcast %cst_5 : f32 to vector<8x512xf32>
    %8 = arith.maximumf %6, %7 : vector<8x512xf32>
    %9 = arith.truncf %8 : vector<8x512xf32> to vector<8x512xbf16>
    %c0_6 = arith.constant 0 : index
    %c0_7 = arith.constant 0 : index
    %10 = vector.load %arg4[%c0_6, %c0_7] : memref<512x128xbf16, #tpu.memory_space<vmem>>, vector<512x128xbf16>
    %cst_8 = arith.constant dense<0.000000e+00> : vector<8x128xf32>
    %11 = tpu.matmul %9, %10, %cst_8 {dimension_numbers = #tpu.dot_dimension_numbers<[1], [0], [0], [1], [0, 0, 1, 1], [], []>} : vector<8x512xbf16>, vector<512x128xbf16>, vector<8x128xf32> -> vector<8x128xf32>
    %c0_9 = arith.constant 0 : index
    %c0_10 = arith.constant 0 : index
    %12 = vector.load %arg5[%c0_9, %c0_10] : memref<1x128xf32, #tpu.memory_space<vmem>>, vector<1x128xf32>
    %13 = vector.broadcast %12 : vector<1x128xf32> to vector<8x128xf32>
    %14 = arith.addf %11, %13 : vector<8x128xf32>
    %cst_11 = arith.constant 0.000000e+00 : f32
    %15 = vector.broadcast %cst_11 : f32 to vector<8x128xf32>
    %16 = arith.maximumf %14, %15 : vector<8x128xf32>
    %17 = arith.truncf %16 : vector<8x128xf32> to vector<8x128xbf16>
    %c0_12 = arith.constant 0 : index
    %c0_13 = arith.constant 0 : index
    %18 = vector.load %arg6[%c0_12, %c0_13] : memref<128x128xbf16, #tpu.memory_space<vmem>>, vector<128x128xbf16>
    %cst_14 = arith.constant dense<0.000000e+00> : vector<8x128xf32>
    %19 = tpu.matmul %17, %18, %cst_14 {dimension_numbers = #tpu.dot_dimension_numbers<[1], [0], [0], [1], [0, 0, 1, 1], [], []>} : vector<8x128xbf16>, vector<128x128xbf16>, vector<8x128xf32> -> vector<8x128xf32>
    %c0_15 = arith.constant 0 : index
    %c0_16 = arith.constant 0 : index
    %20 = vector.load %arg7[%c0_15, %c0_16] : memref<1x128xf32, #tpu.memory_space<vmem>>, vector<1x128xf32>
    %21 = vector.broadcast %20 : vector<1x128xf32> to vector<8x128xf32>
    %22 = arith.addf %19, %21 : vector<8x128xf32>
    %cst_17 = arith.constant 0.000000e+00 : f32
    %23 = vector.broadcast %cst_17 : f32 to vector<8x128xf32>
    %24 = arith.maximumf %22, %23 : vector<8x128xf32>
    %25 = arith.truncf %24 : vector<8x128xf32> to vector<8x128xbf16>
    %c0_18 = arith.constant 0 : index
    %c0_19 = arith.constant 0 : index
    %26 = vector.load %arg8[%c0_18, %c0_19] : memref<128x128xbf16, #tpu.memory_space<vmem>>, vector<128x128xbf16>
    %cst_20 = arith.constant dense<0.000000e+00> : vector<8x128xf32>
    %27 = tpu.matmul %25, %26, %cst_20 {dimension_numbers = #tpu.dot_dimension_numbers<[1], [0], [0], [1], [0, 0, 1, 1], [], []>} : vector<8x128xbf16>, vector<128x128xbf16>, vector<8x128xf32> -> vector<8x128xf32>
    %c0_21 = arith.constant 0 : index
    %c0_22 = arith.constant 0 : index
    %28 = vector.load %arg9[%c0_21, %c0_22] : memref<1x128xf32, #tpu.memory_space<vmem>>, vector<1x128xf32>
    %29 = vector.broadcast %28 : vector<1x128xf32> to vector<8x128xf32>
    %30 = arith.addf %27, %29 : vector<8x128xf32>
    %31 = vector.extract_strided_slice %30 {offsets = [0, 0], sizes = [8, 2], strides = [1, 1]} : vector<8x128xf32> to vector<8x2xf32>
    %c0_23 = arith.constant 0 : index
    %c0_24 = arith.constant 0 : index
    %32 = vector.load %arg10[%c0_23, %c0_24] : memref<8x2xf32, #tpu.memory_space<vmem>>, vector<8x2xf32>
    tpu.vector_store %arg10[%c0_23, %c0_24], %31 {strides = array<i32>} : memref<8x2xf32, #tpu.memory_space<vmem>>, vector<8x2xf32>,
    return
  }
  func.func @transform_0(%arg0: i32) -> (i32, i32) {
    %c0_i32 = arith.constant 0 : i32
    %c0_i32_0 = arith.constant 0 : i32
    return %arg0, %c0_i32 : i32, i32
  }
  func.func @transform_1(%arg0: i32) -> (i32, i32) {
    %c0_i32 = arith.constant 0 : i32
    %c0_i32_0 = arith.constant 0 : i32
    %c0_i32_1 = arith.constant 0 : i32
    return %c0_i32, %c0_i32_0 : i32, i32
  }
  func.func @transform_2(%arg0: i32) -> (i32, i32) {
    %c0_i32 = arith.constant 0 : i32
    %c0_i32_0 = arith.constant 0 : i32
    %c0_i32_1 = arith.constant 0 : i32
    return %c0_i32, %c0_i32_0 : i32, i32
  }
  func.func @transform_3(%arg0: i32) -> (i32, i32) {
    %c0_i32 = arith.constant 0 : i32
    %c0_i32_0 = arith.constant 0 : i32
    %c0_i32_1 = arith.constant 0 : i32
    return %c0_i32, %c0_i32_0 : i32, i32
  }
  func.func @transform_4(%arg0: i32) -> (i32, i32) {
    %c0_i32 = arith.constant 0 : i32
    %c0_i32_0 = arith.constant 0 : i32
    %c0_i32_1 = arith.constant 0 : i32
    return %c0_i32, %c0_i32_0 : i32, i32
  }
  func.func @transform_5(%arg0: i32) -> (i32, i32) {
    %c0_i32 = arith.constant 0 : i32
    %c0_i32_0 = arith.constant 0 : i32
    %c0_i32_1 = arith.constant 0 : i32
    return %c0_i32, %c0_i32_0 : i32, i32
  }
  func.func @transform_6(%arg0: i32) -> (i32, i32) {
    %c0_i32 = arith.constant 0 : i32
    %c0_i32_0 = arith.constant 0 : i32
    %c0_i32_1 = arith.constant 0 : i32
    return %c0_i32, %c0_i32_0 : i32, i32
  }
  func.func @transform_7(%arg0: i32) -> (i32, i32) {
    %c0_i32 = arith.constant 0 : i32
    %c0_i32_0 = arith.constant 0 : i32
    %c0_i32_1 = arith.constant 0 : i32
    return %c0_i32, %c0_i32_0 : i32, i32
  }
  func.func @transform_8(%arg0: i32) -> (i32, i32) {
    %c0_i32 = arith.constant 0 : i32
    %c0_i32_0 = arith.constant 0 : i32
    %c0_i32_1 = arith.constant 0 : i32
    return %c0_i32, %c0_i32_0 : i32, i32
  }
  func.func @transform_9(%arg0: i32) -> (i32, i32) {
    %c0_i32 = arith.constant 0 : i32
    %c0_i32_0 = arith.constant 0 : i32
    return %arg0, %c0_i32 : i32, i32
  }
}

</mosaic_0001>

<llo_original>
// kernel: tpu_custom_call.1
$region0: #{tpu_custom_call.1}
  #allocation0 [shape = 'u32[]', space=smem, size = 0x4, offset = 0x4, fixed_abs, tag = 'smem constant byte address 0x4 - core index']
  #allocation1 [shape = 'u32[144,128]{1,0:T(1,128)}', space=vmem, size = 0x12000, scoped, tag = 'internal scratch']
  %s0 = inlined_call_operand.hbm [shape: f32[8,32], index: 0, kind: input, shape index: {}]
  %s1 = inlined_call_operand.hbm [shape: bf16[32,512], index: 1, kind: input, shape index: {}]
  %s2 = inlined_call_operand.hbm [shape: f32[1,512], index: 2, kind: input, shape index: {}]
  %s3 = inlined_call_operand.hbm [shape: bf16[512,128], index: 3, kind: input, shape index: {}]
  %s4 = inlined_call_operand.vmem [shape: f32[1,128], index: 4, kind: input, shape index: {}]
  %s5 = inlined_call_operand.hbm [shape: bf16[128,128], index: 5, kind: input, shape index: {}]
  %s6 = inlined_call_operand.vmem [shape: f32[1,128], index: 6, kind: input, shape index: {}]
  %s7 = inlined_call_operand.hbm [shape: bf16[128,128], index: 7, kind: input, shape index: {}]
  %s8 = inlined_call_operand.vmem [shape: f32[1,128], index: 8, kind: input, shape index: {}]
  %s9 = inlined_call_operand.vmem [shape: f32[8,2], index: 9, kind: output, shape index: {}]
  %s10 = sld [smem:[#allocation0]]
  $region70: #{tpu_custom_call.1} parent=0
    _
  %s12 = ssub.s32 1, %s10
  %s13 = scalar_select 0, %s12, %s10
  $region1: #{tpu_custom_call.1} parent=0
    #allocation2 [shape = 'u8[4096]{0}', space=vmem, size = 0x1000, scoped, tag = 'input window, operand 0, single buffered']
    #allocation3 [shape = 's32[1]{0}', space=sflag, size = 0x4, scoped, tag = 'scoped memory for tpu_custom_call.1']
    #allocation4 [shape = 'u8[32768]{0}', space=vmem, size = 0x8000, scoped, tag = 'input window, operand 1, single buffered']
    #allocation5 [shape = 's32[1]{0}', space=sflag, size = 0x4, scoped, tag = 'scoped memory for tpu_custom_call.1']
    #allocation6 [shape = 'u8[2048]{0}', space=vmem, size = 0x800, scoped, tag = 'input window, operand 2, single buffered']
    #allocation7 [shape = 'u8[131072]{0}', space=vmem, size = 0x20000, scoped, tag = 'input window, operand 3, single buffered']
    #allocation8 [shape = 's32[1]{0}', space=sflag, size = 0x4, scoped, tag = 'scoped memory for tpu_custom_call.1']
    #allocation9 [shape = 'u8[32768]{0}', space=vmem, size = 0x8000, scoped, tag = 'input window, operand 5, single buffered']
    #allocation10 [shape = 'u8[32768]{0}', space=vmem, size = 0x8000, scoped, tag = 'input window, operand 7, single buffered']
    #allocation11 [shape = 's32[1]{0}', space=sflag, size = 0x4, scoped, tag = 'scoped memory for tpu_custom_call.1']
    %14 = vsyncpa [#allocation3], 0
    %15 = vsyncpa [#allocation5], 0
    %16 = vsyncpa [#allocation8], 0
    %17 = vsyncpa [#allocation11], 0
    // Predicated region
    $region2: #{tpu_custom_call.1} parent=1 // pred_check
      _
    $region3: #{tpu_custom_call.1} parent=1 // pred_check_branch
      %19 = sbr.rel (0) target = $region5
    $region4: #{tpu_custom_call.1} parent=1 // pred_region
      %s21 = ssub.s32 128, 128
      %22 = vsyncadd [#allocation3], %s21
      %s24 = sshll.u32 [#allocation2], 4
      %s25 = int_to_ptr.vmem [resolvable:$true] %s24
      %27 = dma.hbm_to_vmem [thread:$0]  %s0, 128, %s25, [#allocation3]
    $region5: #{tpu_custom_call.1} parent=1 // pred_fallthru
      _
    // Predicated region
    $region6: #{tpu_custom_call.1} parent=1 // pred_check
      _
    $region7: #{tpu_custom_call.1} parent=1 // pred_check_branch
      %29 = sbr.rel (0) target = $region9
    $region8: #{tpu_custom_call.1} parent=1 // pred_region
      %s31 = ssub.s32 1024, 1024
      %32 = vsyncadd [#allocation5], %s31
      %s33 = sshll.u32 [#allocation4], 4
      %s34 = int_to_ptr.vmem [resolvable:$true] %s33
      %39 = dma.hbm_to_vmem [thread:$0]  %s1, 1024, %s34, [#allocation5], 256, 256, 16
    $region9: #{tpu_custom_call.1} parent=1 // pred_fallthru
      _
    // Predicated region
    $region10: #{tpu_custom_call.1} parent=1 // pred_check
      _
    $region11: #{tpu_custom_call.1} parent=1 // pred_check_branch
      %41 = sbr.rel (0) target = $region13
    $region12: #{tpu_custom_call.1} parent=1 // pred_region
      %s43 = ssub.s32 64, 64
      %44 = vsyncadd [#allocation5], %s43
      %s46 = sshll.u32 [#allocation6], 4
      %s47 = int_to_ptr.vmem [resolvable:$true] %s46
      %49 = dma.hbm_to_vmem [thread:$0]  %s2, 64, %s47, [#allocation5]
    $region13: #{tpu_custom_call.1} parent=1 // pred_fallthru
      _
    // Predicated region
    $region14: #{tpu_custom_call.1} parent=1 // pred_check
      _
    $region15: #{tpu_custom_call.1} parent=1 // pred_check_branch
      %51 = sbr.rel (0) target = $region17
    $region16: #{tpu_custom_call.1} parent=1 // pred_region
      %s53 = ssub.s32 4096, 4096
      %54 = vsyncadd [#allocation8], %s53
      %s55 = sshll.u32 [#allocation7], 4
      %s56 = int_to_ptr.vmem [resolvable:$true] %s55
      %61 = dma.hbm_to_vmem [thread:$0]  %s3, 4096, %s56, [#allocation8], 64, 64, 4
    $region17: #{tpu_custom_call.1} parent=1 // pred_fallthru
      _
    // Predicated region
    $region18: #{tpu_custom_call.1} parent=1 // pred_check
      _
    $region19: #{tpu_custom_call.1} parent=1 // pred_check_branch
      %63 = sbr.rel (0) target = $region21
    $region20: #{tpu_custom_call.1} parent=1 // pred_region
      _
    $region21: #{tpu_custom_call.1} parent=1 // pred_fallthru
      _
    // Predicated region
    $region22: #{tpu_custom_call.1} parent=1 // pred_check
      _
    $region23: #{tpu_custom_call.1} parent=1 // pred_check_branch
      %65 = sbr.rel (0) target = $region25
    $region24: #{tpu_custom_call.1} parent=1 // pred_region
      %s67 = ssub.s32 1024, 1024
      %68 = vsyncadd [#allocation8], %s67
      %s69 = sshll.u32 [#allocation9], 4
      %s70 = int_to_ptr.vmem [resolvable:$true] %s69
      %75 = dma.hbm_to_vmem [thread:$0]  %s5, 1024, %s70, [#allocation8], 64, 64, 4
    $region25: #{tpu_custom_call.1} parent=1 // pred_fallthru
      _
    // Predicated region
    $region26: #{tpu_custom_call.1} parent=1 // pred_check
      _
    $region27: #{tpu_custom_call.1} parent=1 // pred_check_branch
      %77 = sbr.rel (0) target = $region29
    $region28: #{tpu_custom_call.1} parent=1 // pred_region
      _
    $region29: #{tpu_custom_call.1} parent=1 // pred_fallthru
      _
    // Predicated region
    $region30: #{tpu_custom_call.1} parent=1 // pred_check
      _
    $region31: #{tpu_custom_call.1} parent=1 // pred_check_branch
      %79 = sbr.rel (0) target = $region33
    $region32: #{tpu_custom_call.1} parent=1 // pred_region
      %s81 = ssub.s32 1024, 1024
      %82 = vsyncadd [#allocation11], %s81
      %s83 = sshll.u32 [#allocation10], 4
      %s84 = int_to_ptr.vmem [resolvable:$true] %s83
      %89 = dma.hbm_to_vmem [thread:$0]  %s7, 1024, %s84, [#allocation11], 64, 64, 4
    $region33: #{tpu_custom_call.1} parent=1 // pred_fallthru
      _
    // Predicated region
    $region34: #{tpu_custom_call.1} parent=1 // pred_check
      _
    $region35: #{tpu_custom_call.1} parent=1 // pred_check_branch
      %91 = sbr.rel (0) target = $region37
    $region36: #{tpu_custom_call.1} parent=1 // pred_region
      _
    $region37: #{tpu_custom_call.1} parent=1 // pred_fallthru
      _
    // Predicated region
    $region38: #{tpu_custom_call.1} parent=1 // pred_check
      _
    $region39: #{tpu_custom_call.1} parent=1 // pred_check_branch
      %93 = sbr.rel (0) target = $region41
    $region40: #{tpu_custom_call.1} parent=1 // pred_region
      %94 = dma.done [#allocation3], 128
    $region41: #{tpu_custom_call.1} parent=1 // pred_fallthru
      _
    // Predicated region
    $region42: #{tpu_custom_call.1} parent=1 // pred_check
      _
    $region43: #{tpu_custom_call.1} parent=1 // pred_check_branch
      %96 = sbr.rel (0) target = $region45
    $region44: #{tpu_custom_call.1} parent=1 // pred_region
      %97 = dma.done [#allocation5], 1024
    $region45: #{tpu_custom_call.1} parent=1 // pred_fallthru
      _
    // Predicated region
    $region46: #{tpu_custom_call.1} parent=1 // pred_check
      _
    $region47: #{tpu_custom_call.1} parent=1 // pred_check_branch
      %99 = sbr.rel (0) target = $region49
    $region48: #{tpu_custom_call.1} parent=1 // pred_region
      %100 = dma.done [#allocation5], 64
    $region49: #{tpu_custom_call.1} parent=1 // pred_fallthru
      _
    // Predicated region
    $region50: #{tpu_custom_call.1} parent=1 // pred_check
      _
    $region51: #{tpu_custom_call.1} parent=1 // pred_check_branch
      %102 = sbr.rel (0) target = $region53
    $region52: #{tpu_custom_call.1} parent=1 // pred_region
      %103 = dma.done [#allocation8], 4096
    $region53: #{tpu_custom_call.1} parent=1 // pred_fallthru
      _
    // Predicated region
    $region54: #{tpu_custom_call.1} parent=1 // pred_check
      _
    $region55: #{tpu_custom_call.1} parent=1 // pred_check_branch
      %105 = sbr.rel (0) target = $region57
    $region56: #{tpu_custom_call.1} parent=1 // pred_region
      %106 = dma.done [#allocation8], 1024
    $region57: #{tpu_custom_call.1} parent=1 // pred_fallthru
      _
    // Predicated region
    $region58: #{tpu_custom_call.1} parent=1 // pred_check
      _
    $region59: #{tpu_custom_call.1} parent=1 // pred_check_branch
      %108 = sbr.rel (0) target = $region61
    $region60: #{tpu_custom_call.1} parent=1 // pred_region
      %109 = dma.done [#allocation11], 1024
    $region61: #{tpu_custom_call.1} parent=1 // pred_fallthru
      _
    %v111 = vld [vmem:[#allocation2] sm:$0xff]
    %v112 = vpack.c.bf16 %v111, %v111
    %v113 = vld [vmem:[#allocation4] sm:$0xff]
    %v114 = vld [vmem:[#allocation4 + $0x8] sm:$0xff]
    %v115 = vld [vmem:[#allocation4 + $0x10] sm:$0xff]
    %v116 = vld [vmem:[#allocation4 + $0x18] sm:$0xff]
    %v117 = vld [vmem:[#allocation4 + $0x20] sm:$0xff]
    %v118 = vld [vmem:[#allocation4 + $0x28] sm:$0xff]
    %v119 = vld [vmem:[#allocation4 + $0x30] sm:$0xff]
    %v120 = vld [vmem:[#allocation4 + $0x38] sm:$0xff]
    %v121 = vld [vmem:[#allocation6] sm:$0xf]
    %v123 = vlaneseq
    %v124 = vshrl.u32 %v123, 7
    %v125 = vsub.s32 0, %v124
    %v126 = vrot.slane %v121, %v125
    %v127 = vlaneseq
    %v128 = vshrl.u32 %v127, 7
    %v129 = vsub.s32 1, %v128
    %v130 = vrot.slane %v121, %v129
    %v131 = vlaneseq
    %v132 = vshrl.u32 %v131, 7
    %v133 = vsub.s32 2, %v132
    %v134 = vrot.slane %v121, %v133
    %v135 = vlaneseq
    %v136 = vshrl.u32 %v135, 7
    %v137 = vsub.s32 3, %v136
    %v138 = vrot.slane %v121, %v137
    %v151 = vunpack.c.l.b16 %v113
    %v152 = vunpack.c.h.b16 %v113
    %v153 = vunpack.c.l.b16 %v114
    %v154 = vunpack.c.h.b16 %v114
    %v155 = vunpack.c.l.b16 %v115
    %v156 = vunpack.c.h.b16 %v115
    %v157 = vunpack.c.l.b16 %v116
    %v158 = vunpack.c.h.b16 %v116
    %v159 = vunpack.c.l.b16 %v117
    %v160 = vunpack.c.h.b16 %v117
    %v161 = vunpack.c.l.b16 %v118
    %v162 = vunpack.c.h.b16 %v118
    %v163 = vunpack.c.l.b16 %v119
    %v164 = vunpack.c.h.b16 %v119
    %v165 = vunpack.c.l.b16 %v120
    %v166 = vunpack.c.h.b16 %v120
    %v167 = vpack.c.b16 %v155, %v151
    %v168 = vpack.c.b16 %v156, %v152
    %v169 = vpack.c.b16 %v157, %v153
    %v170 = vpack.c.b16 %v158, %v154
    %v171 = vpack.c.b16 %v163, %v159
    %v172 = vpack.c.b16 %v164, %v160
    %v173 = vpack.c.b16 %v165, %v161
    %v174 = vpack.c.b16 %v166, %v162
    %vm183 = vcmask 261120
    %v185 = vsel %vm183, %v112, 0
    %187 = vmatprep.subr.bf16.mxu0 0
    %188 = vmatpush1.bf16.msra.mxu0 0
    %189 = vmatprep.subr.bf16.mxu0 0
    %190 = vmatpush1.bf16.msra.mxu0 0
    %191 = vmatprep.subr.bf16.mxu0 0
    %192 = vmatpush1.bf16.msra.mxu0 0
    %193 = vmatprep.subr.bf16.mxu0 0
    %194 = vmatpush1.bf16.msra.mxu0 0
    %195 = vmatprep.subr.bf16.mxu0 0
    %196 = vmatpush1.bf16.msra.mxu0 0
    %197 = vmatprep.subr.bf16.mxu0 0
    %198 = vmatpush1.bf16.msra.mxu0 0
    %199 = vmatprep.subr.bf16.mxu0 %v172
    %200 = vmatpush1.bf16.msra.mxu0 %v171
    %201 = vmatprep.subr.bf16.mxu0 %v168
    %202 = vmatpush1.bf16.msra.mxu0 %v167
    %203 = vmatprep.subr.bf16.mxu0 0
    %204 = vmatpush2.bf16.msra.mxu0 0
    %205 = vmatprep.subr.bf16.mxu0 0
    %206 = vmatpush2.bf16.msra.mxu0 0
    %207 = vmatprep.subr.bf16.mxu0 0
    %208 = vmatpush2.bf16.msra.mxu0 0
    %209 = vmatprep.subr.bf16.mxu0 0
    %210 = vmatpush2.bf16.msra.mxu0 0
    %211 = vmatprep.subr.bf16.mxu0 0
    %212 = vmatpush2.bf16.msra.mxu0 0
    %213 = vmatprep.subr.bf16.mxu0 0
    %214 = vmatpush2.bf16.msra.mxu0 0
    %215 = vmatprep.subr.bf16.mxu0 0
    %216 = vmatpush2.bf16.msra.mxu0 0
    %217 = vmatprep.subr.bf16.mxu0 0
    %218 = vmatpush2.bf16.msra.mxu0 0
    %219 = vmatprep.mubr.bf16.mxu0 0
    %220 = vmatmul.mubr.bf16.gmra.mxu0 %v185
    %v221 = vpop.f32.mrf.mxu0
    %v222 = vadd.f32 %v126, %v221
    %v223 = vpop.f32.mrf.mxu0
    %v224 = vadd.f32 %v130, %v223
    %v225 = vpop.f32.mrf.mxu0
    %v226 = vpop.f32.mrf.mxu0
    %227 = vdwg.mxu0
    %228 = vmatprep.subr.bf16.mxu0 0
    %229 = vmatpush1.bf16.msra.mxu0 0
    %230 = vmatprep.subr.bf16.mxu0 0
    %231 = vmatpush1.bf16.msra.mxu0 0
    %232 = vmatprep.subr.bf16.mxu0 0
    %233 = vmatpush1.bf16.msra.mxu0 0
    %234 = vmatprep.subr.bf16.mxu0 0
    %235 = vmatpush1.bf16.msra.mxu0 0
    %236 = vmatprep.subr.bf16.mxu0 0
    %237 = vmatpush1.bf16.msra.mxu0 0
    %238 = vmatprep.subr.bf16.mxu0 0
    %239 = vmatpush1.bf16.msra.mxu0 0
    %240 = vmatprep.subr.bf16.mxu0 %v174
    %241 = vmatpush1.bf16.msra.mxu0 %v173
    %242 = vmatprep.subr.bf16.mxu0 %v170
    %243 = vmatpush1.bf16.msra.mxu0 %v169
    %244 = vmatprep.subr.bf16.mxu0 0
    %245 = vmatpush2.bf16.msra.mxu0 0
    %246 = vmatprep.subr.bf16.mxu0 0
    %247 = vmatpush2.bf16.msra.mxu0 0
    %248 = vmatprep.subr.bf16.mxu0 0
    %249 = vmatpush2.bf16.msra.mxu0 0
    %250 = vmatprep.subr.bf16.mxu0 0
    %251 = vmatpush2.bf16.msra.mxu0 0
    %252 = vmatprep.subr.bf16.mxu0 0
    %253 = vmatpush2.bf16.msra.mxu0 0
    %254 = vmatprep.subr.bf16.mxu0 0
    %255 = vmatpush2.bf16.msra.mxu0 0
    %256 = vmatprep.subr.bf16.mxu0 0
    %257 = vmatpush2.bf16.msra.mxu0 0
    %258 = vmatprep.subr.bf16.mxu0 0
    %259 = vmatpush2.bf16.msra.mxu0 0
    %260 = vmatprep.mubr.bf16.mxu0 0
    %261 = vmatmul.mubr.bf16.gmra.mxu0 %v185
    %v262 = vpop.f32.mrf.mxu0
    %v263 = vadd.f32 %v134, %v262
    %v264 = vpop.f32.mrf.mxu0
    %v265 = vadd.f32 %v138, %v264
    %v266 = vpop.f32.mrf.mxu0
    %v267 = vpop.f32.mrf.mxu0
    %268 = vdwg.mxu0
    %v269 = vmax.f32 %v222, 0.0
    %v270 = vmax.f32 %v224, 0.0
    %v271 = vmax.f32 %v263, 0.0
    %v272 = vmax.f32 %v265, 0.0
    %v273 = vpack.c.bf16 %v269, %v269
    %v274 = vpack.c.bf16 %v270, %v270
    %v275 = vpack.c.bf16 %v271, %v271
    %v276 = vpack.c.bf16 %v272, %v272
    %v277 = vld [vmem:[#allocation7] sm:$0xf]
    %v278 = vld [vmem:[#allocation7 + $0x4] sm:$0xf]
    %v279 = vld [vmem:[#allocation7 + $0x8] sm:$0xf]
    %v280 = vld [vmem:[#allocation7 + $0xc] sm:$0xf]
    %v281 = vld [vmem:[#allocation7 + $0x10] sm:$0xf]
    %v282 = vld [vmem:[#allocation7 + $0x14] sm:$0xf]
    %v283 = vld [vmem:[#allocation7 + $0x18] sm:$0xf]
    %v284 = vld [vmem:[#allocation7 + $0x1c] sm:$0xf]
    %v285 = vld [vmem:[#allocation7 + $0x20] sm:$0xf]
    %v286 = vld [vmem:[#allocation7 + $0x24] sm:$0xf]
    %v287 = vld [vmem:[#allocation7 + $0x28] sm:$0xf]
    %v288 = vld [vmem:[#allocation7 + $0x2c] sm:$0xf]
    %v289 = vld [vmem:[#allocation7 + $0x30] sm:$0xf]
    %v290 = vld [vmem:[#allocation7 + $0x34] sm:$0xf]
    %v291 = vld [vmem:[#allocation7 + $0x38] sm:$0xf]
    %v292 = vld [vmem:[#allocation7 + $0x3c] sm:$0xf]
    %v293 = vld [vmem:[#allocation7 + $0x40] sm:$0xf]
    %v294 = vld [vmem:[#allocation7 + $0x44] sm:$0xf]
    %v295 = vld [vmem:[#allocation7 + $0x48] sm:$0xf]
    %v296 = vld [vmem:[#allocation7 + $0x4c] sm:$0xf]
    %v297 = vld [vmem:[#allocation7 + $0x50] sm:$0xf]
    %v298 = vld [vmem:[#allocation7 + $0x54] sm:$0xf]
    %v299 = vld [vmem:[#allocation7 + $0x58] sm:$0xf]
    %v300 = vld [vmem:[#allocation7 + $0x5c] sm:$0xf]
    %v301 = vld [vmem:[#allocation7 + $0x60] sm:$0xf]
    %v302 = vld [vmem:[#allocation7 + $0x64] sm:$0xf]
    %v303 = vld [vmem:[#allocation7 + $0x68] sm:$0xf]
    %v304 = vld [vmem:[#allocation7 + $0x6c] sm:$0xf]
    %v305 = vld [vmem:[#allocation7 + $0x70] sm:$0xf]
    %v306 = vld [vmem:[#allocation7 + $0x74] sm:$0xf]
    %v307 = vld [vmem:[#allocation7 + $0x78] sm:$0xf]
    %v308 = vld [vmem:[#allocation7 + $0x7c] sm:$0xf]
    %v309 = vld [vmem:[#allocation7 + $0x80] sm:$0xf]
    %v310 = vld [vmem:[#allocation7 + $0x84] sm:$0xf]
    %v311 = vld [vmem:[#allocation7 + $0x88] sm:$0xf]
    %v312 = vld [vmem:[#allocation7 + $0x8c] sm:$0xf]
    %v313 = vld [vmem:[#allocation7 + $0x90] sm:$0xf]
    %v314 = vld [vmem:[#allocation7 + $0x94] sm:$0xf]
    %v315 = vld [vmem:[#allocation7 + $0x98] sm:$0xf]
    %v316 = vld [vmem:[#allocation7 + $0x9c] sm:$0xf]
    %v317 = vld [vmem:[#allocation7 + $0xa0] sm:$0xf]
    %v318 = vld [vmem:[#allocation7 + $0xa4] sm:$0xf]
    %v319 = vld [vmem:[#allocation7 + $0xa8] sm:$0xf]
    %v320 = vld [vmem:[#allocation7 + $0xac] sm:$0xf]
    %v321 = vld [vmem:[#allocation7 + $0xb0] sm:$0xf]
    %v322 = vld [vmem:[#allocation7 + $0xb4] sm:$0xf]
    %v323 = vld [vmem:[#allocation7 + $0xb8] sm:$0xf]
    %v324 = vld [vmem:[#allocation7 + $0xbc] sm:$0xf]
    %v325 = vld [vmem:[#allocation7 + $0xc0] sm:$0xf]
    %v326 = vld [vmem:[#allocation7 + $0xc4] sm:$0xf]
    %v327 = vld [vmem:[#allocation7 + $0xc8] sm:$0xf]
    %v328 = vld [vmem:[#allocation7 + $0xcc] sm:$0xf]
    %v329 = vld [vmem:[#allocation7 + $0xd0] sm:$0xf]
    %v330 = vld [vmem:[#allocation7 + $0xd4] sm:$0xf]
    %v331 = vld [vmem:[#allocation7 + $0xd8] sm:$0xf]
    %v332 = vld [vmem:[#allocation7 + $0xdc] sm:$0xf]
    %v333 = vld [vmem:[#allocation7 + $0xe0] sm:$0xf]
    %v334 = vld [vmem:[#allocation7 + $0xe4] sm:$0xf]
    %v335 = vld [vmem:[#allocation7 + $0xe8] sm:$0xf]
    %v336 = vld [vmem:[#allocation7 + $0xec] sm:$0xf]
    %v337 = vld [vmem:[#allocation7 + $0xf0] sm:$0xf]
    %v338 = vld [vmem:[#allocation7 + $0xf4] sm:$0xf]
    %v339 = vld [vmem:[#allocation7 + $0xf8] sm:$0xf]
    %v340 = vld [vmem:[#allocation7 + $0xfc] sm:$0xf]
    %v341 = vld [vmem:[%s4] sm:$0x1]
    %v343 = vlaneseq
    %v344 = vshrl.u32 %v343, 7
    %v345 = vsub.s32 0, %v344
    %v346 = vrot.slane %v341, %v345
    %v412 = vunpack.c.l.b16 %v277
    %v413 = vunpack.c.l.b16 %v278
    %v414 = vunpack.c.l.b16 %v279
    %v415 = vunpack.c.l.b16 %v280
    %v416 = vunpack.c.l.b16 %v281
    %v417 = vunpack.c.l.b16 %v282
    %v418 = vunpack.c.l.b16 %v283
    %v419 = vunpack.c.l.b16 %v284
    %v420 = vunpack.c.l.b16 %v285
    %v421 = vunpack.c.l.b16 %v286
    %v422 = vunpack.c.l.b16 %v287
    %v423 = vunpack.c.l.b16 %v288
    %v424 = vunpack.c.l.b16 %v289
    %v425 = vunpack.c.l.b16 %v290
    %v426 = vunpack.c.l.b16 %v291
    %v427 = vunpack.c.l.b16 %v292
    %v428 = vunpack.c.l.b16 %v293
    %v429 = vunpack.c.l.b16 %v294
    %v430 = vunpack.c.l.b16 %v295
    %v431 = vunpack.c.l.b16 %v296
    %v432 = vunpack.c.l.b16 %v297
    %v433 = vunpack.c.l.b16 %v298
    %v434 = vunpack.c.l.b16 %v299
    %v435 = vunpack.c.l.b16 %v300
    %v436 = vunpack.c.l.b16 %v301
    %v437 = vunpack.c.l.b16 %v302
    %v438 = vunpack.c.l.b16 %v303
    %v439 = vunpack.c.l.b16 %v304
    %v440 = vunpack.c.l.b16 %v305
    %v441 = vunpack.c.l.b16 %v306
    %v442 = vunpack.c.l.b16 %v307
    %v443 = vunpack.c.l.b16 %v308
    %v444 = vunpack.c.l.b16 %v309
    %v445 = vunpack.c.l.b16 %v310
    %v446 = vunpack.c.l.b16 %v311
    %v447 = vunpack.c.l.b16 %v312
    %v448 = vunpack.c.l.b16 %v313
    %v449 = vunpack.c.l.b16 %v314
    %v450 = vunpack.c.l.b16 %v315
    %v451 = vunpack.c.l.b16 %v316
    %v452 = vunpack.c.l.b16 %v317
    %v453 = vunpack.c.l.b16 %v318
    %v454 = vunpack.c.l.b16 %v319
    %v455 = vunpack.c.l.b16 %v320
    %v456 = vunpack.c.l.b16 %v321
    %v457 = vunpack.c.l.b16 %v322
    %v458 = vunpack.c.l.b16 %v323
    %v459 = vunpack.c.l.b16 %v324
    %v460 = vunpack.c.l.b16 %v325
    %v461 = vunpack.c.l.b16 %v326
    %v462 = vunpack.c.l.b16 %v327
    %v463 = vunpack.c.l.b16 %v328
    %v464 = vunpack.c.l.b16 %v329
    %v465 = vunpack.c.l.b16 %v330
    %v466 = vunpack.c.l.b16 %v331
    %v467 = vunpack.c.l.b16 %v332
    %v468 = vunpack.c.l.b16 %v333
    %v469 = vunpack.c.l.b16 %v334
    %v470 = vunpack.c.l.b16 %v335
    %v471 = vunpack.c.l.b16 %v336
    %v472 = vunpack.c.l.b16 %v337
    %v473 = vunpack.c.l.b16 %v338
    %v474 = vunpack.c.l.b16 %v339
    %v475 = vunpack.c.l.b16 %v340
    %v476 = vpack.c.b16 %v413, %v412
    %v477 = vpack.c.b16 %v415, %v414
    %v478 = vpack.c.b16 %v417, %v416
    %v479 = vpack.c.b16 %v419, %v418
    %v480 = vpack.c.b16 %v421, %v420
    %v481 = vpack.c.b16 %v423, %v422
    %v482 = vpack.c.b16 %v425, %v424
    %v483 = vpack.c.b16 %v427, %v426
    %v484 = vpack.c.b16 %v429, %v428
    %v485 = vpack.c.b16 %v431, %v430
    %v486 = vpack.c.b16 %v433, %v432
    %v487 = vpack.c.b16 %v435, %v434
    %v488 = vpack.c.b16 %v437, %v436
    %v489 = vpack.c.b16 %v439, %v438
    %v490 = vpack.c.b16 %v441, %v440
    %v491 = vpack.c.b16 %v443, %v442
    %v492 = vpack.c.b16 %v445, %v444
    %v493 = vpack.c.b16 %v447, %v446
    %v494 = vpack.c.b16 %v449, %v448
    %v495 = vpack.c.b16 %v451, %v450
    %v496 = vpack.c.b16 %v453, %v452
    %v497 = vpack.c.b16 %v455, %v454
    %v498 = vpack.c.b16 %v457, %v456
    %v499 = vpack.c.b16 %v459, %v458
    %v500 = vpack.c.b16 %v461, %v460
    %v501 = vpack.c.b16 %v463, %v462
    %v502 = vpack.c.b16 %v465, %v464
    %v503 = vpack.c.b16 %v467, %v466
    %v504 = vpack.c.b16 %v469, %v468
    %v505 = vpack.c.b16 %v471, %v470
    %v506 = vpack.c.b16 %v473, %v472
    %v507 = vpack.c.b16 %v475, %v474
    %540 = vmatprep.subr.bf16.mxu0 0
    %541 = vmatpush1.bf16.msra.mxu0 %v483
    %542 = vmatprep.subr.bf16.mxu0 0
    %543 = vmatpush1.bf16.msra.mxu0 %v482
    %544 = vmatprep.subr.bf16.mxu0 0
    %545 = vmatpush1.bf16.msra.mxu0 %v481
    %546 = vmatprep.subr.bf16.mxu0 0
    %547 = vmatpush1.bf16.msra.mxu0 %v480
    %548 = vmatprep.subr.bf16.mxu0 0
    %549 = vmatpush1.bf16.msra.mxu0 %v479
    %550 = vmatprep.subr.bf16.mxu0 0
    %551 = vmatpush1.bf16.msra.mxu0 %v478
    %552 = vmatprep.subr.bf16.mxu0 0
    %553 = vmatpush1.bf16.msra.mxu0 %v477
    %554 = vmatprep.subr.bf16.mxu0 0
    %555 = vmatpush1.bf16.msra.mxu0 %v476
    %556 = vmatprep.subr.bf16.mxu0 0
    %557 = vmatpush2.bf16.msra.mxu0 %v491
    %558 = vmatprep.subr.bf16.mxu0 0
    %559 = vmatpush2.bf16.msra.mxu0 %v490
    %560 = vmatprep.subr.bf16.mxu0 0
    %561 = vmatpush2.bf16.msra.mxu0 %v489
    %562 = vmatprep.subr.bf16.mxu0 0
    %563 = vmatpush2.bf16.msra.mxu0 %v488
    %564 = vmatprep.subr.bf16.mxu0 0
    %565 = vmatpush2.bf16.msra.mxu0 %v487
    %566 = vmatprep.subr.bf16.mxu0 0
    %567 = vmatpush2.bf16.msra.mxu0 %v486
    %568 = vmatprep.subr.bf16.mxu0 0
    %569 = vmatpush2.bf16.msra.mxu0 %v485
    %570 = vmatprep.subr.bf16.mxu0 0
    %571 = vmatpush2.bf16.msra.mxu0 %v484
    %572 = vmatprep.mubr.bf16.mxu0 %v274
    %573 = vmatmul.mubr.bf16.gmra.mxu0 %v273
    %v574 = vpop.f32.mrf.mxu0
    %v575 = vadd.f32 %v346, %v574
    %v576 = vpop.f32.mrf.mxu0
    %v577 = vpop.f32.mrf.mxu0
    %v578 = vpop.f32.mrf.mxu0
    %579 = vdwg.mxu0
    %580 = vmatprep.subr.bf16.mxu0 0
    %581 = vmatpush1.bf16.msra.mxu0 %v499
    %582 = vmatprep.subr.bf16.mxu0 0
    %583 = vmatpush1.bf16.msra.mxu0 %v498
    %584 = vmatprep.subr.bf16.mxu0 0
    %585 = vmatpush1.bf16.msra.mxu0 %v497
    %586 = vmatprep.subr.bf16.mxu0 0
    %587 = vmatpush1.bf16.msra.mxu0 %v496
    %588 = vmatprep.subr.bf16.mxu0 0
    %589 = vmatpush1.bf16.msra.mxu0 %v495
    %590 = vmatprep.subr.bf16.mxu0 0
    %591 = vmatpush1.bf16.msra.mxu0 %v494
    %592 = vmatprep.subr.bf16.mxu0 0
    %593 = vmatpush1.bf16.msra.mxu0 %v493
    %594 = vmatprep.subr.bf16.mxu0 0
    %595 = vmatpush1.bf16.msra.mxu0 %v492
    %596 = vmatprep.subr.bf16.mxu0 0
    %597 = vmatpush2.bf16.msra.mxu0 %v507
    %598 = vmatprep.subr.bf16.mxu0 0
    %599 = vmatpush2.bf16.msra.mxu0 %v506
    %600 = vmatprep.subr.bf16.mxu0 0
    %601 = vmatpush2.bf16.msra.mxu0 %v505
    %602 = vmatprep.subr.bf16.mxu0 0
    %603 = vmatpush2.bf16.msra.mxu0 %v504
    %604 = vmatprep.subr.bf16.mxu0 0
    %605 = vmatpush2.bf16.msra.mxu0 %v503
    %606 = vmatprep.subr.bf16.mxu0 0
    %607 = vmatpush2.bf16.msra.mxu0 %v502
    %608 = vmatprep.subr.bf16.mxu0 0
    %609 = vmatpush2.bf16.msra.mxu0 %v501
    %610 = vmatprep.subr.bf16.mxu0 0
    %611 = vmatpush2.bf16.msra.mxu0 %v500
    %612 = vmatprep.mubr.bf16.mxu0 %v276
    %613 = vmatmul.mubr.bf16.gmra.mxu0 %v275
    %v614 = vpop.f32.mrf.mxu0
    %v615 = vadd.f32 %v575, %v614
    %v616 = vpop.f32.mrf.mxu0
    %v617 = vpop.f32.mrf.mxu0
    %v618 = vpop.f32.mrf.mxu0
    %619 = vdwg.mxu0
    %v620 = vmax.f32 %v615, 0.0
    %v621 = vpack.c.bf16 %v620, %v620
    %v622 = vld [vmem:[#allocation9] sm:$0xf]
    %v623 = vld [vmem:[#allocation9 + $0x4] sm:$0xf]
    %v624 = vld [vmem:[#allocation9 + $0x8] sm:$0xf]
    %v625 = vld [vmem:[#allocation9 + $0xc] sm:$0xf]
    %v626 = vld [vmem:[#allocation9 + $0x10] sm:$0xf]
    %v627 = vld [vmem:[#allocation9 + $0x14] sm:$0xf]
    %v628 = vld [vmem:[#allocation9 + $0x18] sm:$0xf]
    %v629 = vld [vmem:[#allocation9 + $0x1c] sm:$0xf]
    %v630 = vld [vmem:[#allocation9 + $0x20] sm:$0xf]
    %v631 = vld [vmem:[#allocation9 + $0x24] sm:$0xf]
    %v632 = vld [vmem:[#allocation9 + $0x28] sm:$0xf]
    %v633 = vld [vmem:[#allocation9 + $0x2c] sm:$0xf]
    %v634 = vld [vmem:[#allocation9 + $0x30] sm:$0xf]
    %v635 = vld [vmem:[#allocation9 + $0x34] sm:$0xf]
    %v636 = vld [vmem:[#allocation9 + $0x38] sm:$0xf]
    %v637 = vld [vmem:[#allocation9 + $0x3c] sm:$0xf]
    %v638 = vld [vmem:[%s6] sm:$0x1]
    %v640 = vlaneseq
    %v641 = vshrl.u32 %v640, 7
    %v642 = vsub.s32 0, %v641
    %v643 = vrot.slane %v638, %v642
    %v661 = vunpack.c.l.b16 %v622
    %v662 = vunpack.c.l.b16 %v623
    %v663 = vunpack.c.l.b16 %v624
    %v664 = vunpack.c.l.b16 %v625
    %v665 = vunpack.c.l.b16 %v626
    %v666 = vunpack.c.l.b16 %v627
    %v667 = vunpack.c.l.b16 %v628
    %v668 = vunpack.c.l.b16 %v629
    %v669 = vunpack.c.l.b16 %v630
    %v670 = vunpack.c.l.b16 %v631
    %v671 = vunpack.c.l.b16 %v632
    %v672 = vunpack.c.l.b16 %v633
    %v673 = vunpack.c.l.b16 %v634
    %v674 = vunpack.c.l.b16 %v635
    %v675 = vunpack.c.l.b16 %v636
    %v676 = vunpack.c.l.b16 %v637
    %v677 = vpack.c.b16 %v662, %v661
    %v678 = vpack.c.b16 %v664, %v663
    %v679 = vpack.c.b16 %v666, %v665
    %v680 = vpack.c.b16 %v668, %v667
    %v681 = vpack.c.b16 %v670, %v669
    %v682 = vpack.c.b16 %v672, %v671
    %v683 = vpack.c.b16 %v674, %v673
    %v684 = vpack.c.b16 %v676, %v675
    %693 = vmatprep.subr.bf16.mxu0 0
    %694 = vmatpush1.bf16.msra.mxu0 %v684
    %695 = vmatprep.subr.bf16.mxu0 0
    %696 = vmatpush1.bf16.msra.mxu0 %v683
    %697 = vmatprep.subr.bf16.mxu0 0
    %698 = vmatpush1.bf16.msra.mxu0 %v682
    %699 = vmatprep.subr.bf16.mxu0 0
    %700 = vmatpush1.bf16.msra.mxu0 %v681
    %701 = vmatprep.subr.bf16.mxu0 0
    %702 = vmatpush1.bf16.msra.mxu0 %v680
    %703 = vmatprep.subr.bf16.mxu0 0
    %704 = vmatpush1.bf16.msra.mxu0 %v679
    %705 = vmatprep.subr.bf16.mxu0 0
    %706 = vmatpush1.bf16.msra.mxu0 %v678
    %707 = vmatprep.subr.bf16.mxu0 0
    %708 = vmatpush1.bf16.msra.mxu0 %v677
    %709 = vmatprep.subr.bf16.mxu0 0
    %710 = vmatpush2.bf16.msra.mxu0 0
    %711 = vmatprep.subr.bf16.mxu0 0
    %712 = vmatpush2.bf16.msra.mxu0 0
    %713 = vmatprep.subr.bf16.mxu0 0
    %714 = vmatpush2.bf16.msra.mxu0 0
    %715 = vmatprep.subr.bf16.mxu0 0
    %716 = vmatpush2.bf16.msra.mxu0 0
    %717 = vmatprep.subr.bf16.mxu0 0
    %718 = vmatpush2.bf16.msra.mxu0 0
    %719 = vmatprep.subr.bf16.mxu0 0
    %720 = vmatpush2.bf16.msra.mxu0 0
    %721 = vmatprep.subr.bf16.mxu0 0
    %722 = vmatpush2.bf16.msra.mxu0 0
    %723 = vmatprep.subr.bf16.mxu0 0
    %724 = vmatpush2.bf16.msra.mxu0 0
    %725 = vmatprep.mubr.bf16.mxu0 0
    %726 = vmatmul.mubr.bf16.gmra.mxu0 %v621
    %v727 = vpop.f32.mrf.mxu0
    %v728 = vadd.f32 %v643, %v727
    %v729 = vpop.f32.mrf.mxu0
    %v730 = vpop.f32.mrf.mxu0
    %v731 = vpop.f32.mrf.mxu0
    %732 = vdwg.mxu0
    %v733 = vmax.f32 %v728, 0.0
    %v734 = vpack.c.bf16 %v733, %v733
    %v735 = vld [vmem:[#allocation10] sm:$0xf]
    %v736 = vld [vmem:[#allocation10 + $0x4] sm:$0xf]
    %v737 = vld [vmem:[#allocation10 + $0x8] sm:$0xf]
    %v738 = vld [vmem:[#allocation10 + $0xc] sm:$0xf]
    %v739 = vld [vmem:[#allocation10 + $0x10] sm:$0xf]
    %v740 = vld [vmem:[#allocation10 + $0x14] sm:$0xf]
    %v741 = vld [vmem:[#allocation10 + $0x18] sm:$0xf]
    %v742 = vld [vmem:[#allocation10 + $0x1c] sm:$0xf]
    %v743 = vld [vmem:[#allocation10 + $0x20] sm:$0xf]
    %v744 = vld [vmem:[#allocation10 + $0x24] sm:$0xf]
    %v745 = vld [vmem:[#allocation10 + $0x28] sm:$0xf]
    %v746 = vld [vmem:[#allocation10 + $0x2c] sm:$0xf]
    %v747 = vld [vmem:[#allocation10 + $0x30] sm:$0xf]
    %v748 = vld [vmem:[#allocation10 + $0x34] sm:$0xf]
    %v749 = vld [vmem:[#allocation10 + $0x38] sm:$0xf]
    %v750 = vld [vmem:[#allocation10 + $0x3c] sm:$0xf]
    %v751 = vld [vmem:[%s8] sm:$0x1]
    %v753 = vlaneseq
    %v754 = vshrl.u32 %v753, 7
    %v755 = vsub.s32 0, %v754
    %v756 = vrot.slane %v751, %v755
    %v774 = vunpack.c.l.b16 %v735
    %v775 = vunpack.c.l.b16 %v736
    %v776 = vunpack.c.l.b16 %v737
    %v777 = vunpack.c.l.b16 %v738
    %v778 = vunpack.c.l.b16 %v739
    %v779 = vunpack.c.l.b16 %v740
    %v780 = vunpack.c.l.b16 %v741
    %v781 = vunpack.c.l.b16 %v742
    %v782 = vunpack.c.l.b16 %v743
    %v783 = vunpack.c.l.b16 %v744
    %v784 = vunpack.c.l.b16 %v745
    %v785 = vunpack.c.l.b16 %v746
    %v786 = vunpack.c.l.b16 %v747
    %v787 = vunpack.c.l.b16 %v748
    %v788 = vunpack.c.l.b16 %v749
    %v789 = vunpack.c.l.b16 %v750
    %v790 = vpack.c.b16 %v775, %v774
    %v791 = vpack.c.b16 %v777, %v776
    %v792 = vpack.c.b16 %v779, %v778
    %v793 = vpack.c.b16 %v781, %v780
    %v794 = vpack.c.b16 %v783, %v782
    %v795 = vpack.c.b16 %v785, %v784
    %v796 = vpack.c.b16 %v787, %v786
    %v797 = vpack.c.b16 %v789, %v788
    %806 = vmatprep.subr.bf16.mxu0 0
    %807 = vmatpush1.bf16.msra.mxu0 %v797
    %808 = vmatprep.subr.bf16.mxu0 0
    %809 = vmatpush1.bf16.msra.mxu0 %v796
    %810 = vmatprep.subr.bf16.mxu0 0
    %811 = vmatpush1.bf16.msra.mxu0 %v795
    %812 = vmatprep.subr.bf16.mxu0 0
    %813 = vmatpush1.bf16.msra.mxu0 %v794
    %814 = vmatprep.subr.bf16.mxu0 0
    %815 = vmatpush1.bf16.msra.mxu0 %v793
    %816 = vmatprep.subr.bf16.mxu0 0
    %817 = vmatpush1.bf16.msra.mxu0 %v792
    %818 = vmatprep.subr.bf16.mxu0 0
    %819 = vmatpush1.bf16.msra.mxu0 %v791
    %820 = vmatprep.subr.bf16.mxu0 0
    %821 = vmatpush1.bf16.msra.mxu0 %v790
    %822 = vmatprep.subr.bf16.mxu0 0
    %823 = vmatpush2.bf16.msra.mxu0 0
    %824 = vmatprep.subr.bf16.mxu0 0
    %825 = vmatpush2.bf16.msra.mxu0 0
    %826 = vmatprep.subr.bf16.mxu0 0
    %827 = vmatpush2.bf16.msra.mxu0 0
    %828 = vmatprep.subr.bf16.mxu0 0
    %829 = vmatpush2.bf16.msra.mxu0 0
    %830 = vmatprep.subr.bf16.mxu0 0
    %831 = vmatpush2.bf16.msra.mxu0 0
    %832 = vmatprep.subr.bf16.mxu0 0
    %833 = vmatpush2.bf16.msra.mxu0 0
    %834 = vmatprep.subr.bf16.mxu0 0
    %835 = vmatpush2.bf16.msra.mxu0 0
    %836 = vmatprep.subr.bf16.mxu0 0
    %837 = vmatpush2.bf16.msra.mxu0 0
    %838 = vmatprep.mubr.bf16.mxu0 0
    %839 = vmatmul.mubr.bf16.gmra.mxu0 %v734
    %v840 = vpop.f32.mrf.mxu0
    %v841 = vadd.f32 %v756, %v840
    %v842 = vpop.f32.mrf.mxu0
    %v843 = vpop.f32.mrf.mxu0
    %v844 = vpop.f32.mrf.mxu0
    %845 = vdwg.mxu0
    %vm846 = vcmask 15360
    %847 = vst.msk [vmem:[%s9] sm:$0xff] %vm846, %v841
    // Predicated region
    $region62: #{tpu_custom_call.1} parent=1 // pred_check
      _
    $region63: #{tpu_custom_call.1} parent=1 // pred_check_branch
      %849 = sbr.rel (0) target = $region65
    $region64: #{tpu_custom_call.1} parent=1 // pred_region
      _
    $region65: #{tpu_custom_call.1} parent=1 // pred_fallthru
      _
    // Predicated region
    $region66: #{tpu_custom_call.1} parent=1 // pred_check
      _
    $region67: #{tpu_custom_call.1} parent=1 // pred_check_branch
      %851 = sbr.rel (0) target = $region69
    $region68: #{tpu_custom_call.1} parent=1 // pred_region
      _
    $region69: #{tpu_custom_call.1} parent=1 // pred_fallthru
      _
    %852 = vsyncpa [#allocation3], 1
    %853 = vsyncpa [#allocation5], 1
    %854 = vsyncpa [#allocation8], 1
    %855 = vsyncpa [#allocation11], 1

</llo_original>
